<compile_context>
chip_gen: v7x
topology: tpu7x:2x2x1
jax: 0.10.0
libtpu: 0.0.40
codegen_flags: <defaults>
</compile_context>

<pallas_src>
import jax
import jax.numpy as jnp
import numpy as np
from jax.experimental import pallas as pl
from jax.experimental.pallas import tpu as pltpu


def _gru_gates(gi, gh, h):
    """torch.nn.GRU cell gate math (gate order r, z, n); everything f32."""
    H = h.shape[-1]
    r = jax.nn.sigmoid(gi[:, 0:H] + gh[:, 0:H])
    z = jax.nn.sigmoid(gi[:, H:2 * H] + gh[:, H:2 * H])
    n = jnp.tanh(gi[:, 2 * H:3 * H] + r * gh[:, 2 * H:3 * H])
    return (1.0 - z) * n + z * h


def _gru_kernel(x2d_ref, wih_ref, whh_ref, bih_ref, bhh_ref, h_out_ref,
                h_carry_ref):
    """One time-chunk of the GRU recurrence.

    x2d_ref     : (TC*N, C)  this chunk's inputs, time-major
    wih_ref     : (C, 3H)    input->hidden weights (gate order r, z, n)
    whh_ref     : (H, 3H)    hidden->hidden weights
    bih_ref     : (1, 3H)    input bias
    bhh_ref     : (1, 3H)    hidden bias
    h_out_ref   : (N, H)     final hidden state (written on the last chunk)
    h_carry_ref : (N, H)     persistent VMEM scratch carrying h across chunks
    """
    c = pl.program_id(0)
    last = pl.num_programs(0) - 1
    N, H = h_out_ref.shape
    TC = x2d_ref.shape[0] // N

    @pl.when(c == 0)
    def _():
        h_carry_ref[...] = jnp.zeros_like(h_carry_ref)

    wih = wih_ref[...]
    whh = whh_ref[...]
    bih = bih_ref[...]
    bhh = bhh_ref[...]

    # Hoisted input projection for the whole chunk: one MXU matmul, result
    # kept in vregs (no VMEM scratch round trip).  f32 accumulation.
    gi_all = jnp.dot(x2d_ref[...].astype(wih.dtype), wih,
                     preferred_element_type=jnp.float32) + bih

    # Independent batch sub-chains only when they don't lengthen the serial
    # chain: N >= 16 with sublane-aligned (multiple-of-8) halves.  At N <= 8
    # one MXU push already covers every batch row, so splitting only adds
    # XLU shuffles and a second push.
    if N >= 16 and N % 16 == 0:
        splits = ((0, N // 2), (N // 2, N))
    else:
        splits = ((0, N),)

    hs = [h_carry_ref[lo:hi, :] for lo, hi in splits]

    # Fully unrolled chunk loop; every gi slice is static and sublane-aligned.
    for t in range(TC):
        gi = gi_all[t * N:(t + 1) * N]
        for i, (lo, hi) in enumerate(splits):
            h = hs[i]
            gh = jnp.dot(h.astype(whh.dtype), whh,
                         preferred_element_type=jnp.float32) + bhh
            hs[i] = _gru_gates(gi[lo:hi], gh, h)

    for (lo, hi), h in zip(splits, hs):
        h_carry_ref[lo:hi, :] = h

    @pl.when(c == last)
    def _():
        for (lo, hi), h in zip(splits, hs):
            h_out_ref[lo:hi, :] = h.astype(h_out_ref.dtype)


def _largest_divisor_leq(n, cap):
    for d in range(min(n, cap), 0, -1):
        if n % d == 0:
            return d
    return 1


def seq_my_encoder_forward(src, w_ih, w_hh, b_ih, b_hh, *,
                           matmul_dtype=jnp.bfloat16, time_chunk=None):
    """Pallas implementation of SeqMyEncoder.forward (has_embedding=False).

    src  : (T, N, C) float32
    w_ih : (3H, C)  PyTorch layout (weight_ih_l0)
    w_hh : (3H, H)  PyTorch layout (weight_hh_l0)
    b_ih : (3H,)
    b_hh : (3H,)
    matmul_dtype : jnp.bfloat16 (default; single-pass MXU) or jnp.float32
                   (tight numerical parity).  Gate math is always f32.
    time_chunk   : steps per grid iteration for long sequences (None = auto).
    returns hidden: (1, N, H) float32
    """
    src = jnp.asarray(src, jnp.float32)
    T, N, C = src.shape
    H = w_hh.shape[1]

    # Pad batch to a sublane multiple (8) so every per-step slice / store is
    # full-vreg aligned; padded rows are independent and sliced off below.
    N_pad = int(-(-N // 8) * 8)
    if N_pad != N:
        src = jnp.pad(src, ((0, 0), (0, N_pad - N), (0, 0)))

    src2d = src.reshape(T * N_pad, C)                       # time-major flatten
    wih_t = jnp.transpose(jnp.asarray(w_ih, jnp.float32)).astype(matmul_dtype)
    whh_t = jnp.transpose(jnp.asarray(w_hh, jnp.float32)).astype(matmul_dtype)
    bih = jnp.asarray(b_ih, jnp.float32).reshape(1, 3 * H)
    bhh = jnp.asarray(b_hh, jnp.float32).reshape(1, 3 * H)

    # Resident single chunk for short sequences; otherwise chunk time so the
    # VMEM footprint is independent of T.
    if time_chunk is None:
        if T <= 64 and T * N_pad * (C + 3 * H) * 4 <= (4 << 20):
            time_chunk = T
        else:
            time_chunk = _largest_divisor_leq(T, 32)
    elif T % time_chunk != 0:
        time_chunk = _largest_divisor_leq(T, time_chunk)
    num_chunks = T // time_chunk

    # Raise the scoped VMEM limit only when the per-chunk estimate needs it.
    est_vmem = 4 * (2 * time_chunk * N_pad * C            # double-buffered src chunk
                    + time_chunk * N_pad * 3 * H          # chunk gi (vregs + spill)
                    + (C + H + 2) * 3 * H                 # weights + biases
                    + 2 * N_pad * H) + (2 << 20)
    vmem_limit = int(min(est_vmem, 96 << 20)) if est_vmem > (32 << 20) else None

    grid_spec = pltpu.PrefetchScalarGridSpec(
        num_scalar_prefetch=0,
        grid=(num_chunks,),
        in_specs=[
            pl.BlockSpec((time_chunk * N_pad, C), lambda c: (c, 0)),
            pl.BlockSpec((C, 3 * H), lambda c: (0, 0)),
            pl.BlockSpec((H, 3 * H), lambda c: (0, 0)),
            pl.BlockSpec((1, 3 * H), lambda c: (0, 0)),
            pl.BlockSpec((1, 3 * H), lambda c: (0, 0)),
        ],
        out_specs=pl.BlockSpec((N_pad, H), lambda c: (0, 0)),
        scratch_shapes=[pltpu.VMEM((N_pad, H), jnp.float32)],
    )

    hidden_nh = pl.pallas_call(
        _gru_kernel,
        out_shape=jax.ShapeDtypeStruct((N_pad, H), jnp.float32),
        grid_spec=grid_spec,
        compiler_params=pltpu.CompilerParams(
            dimension_semantics=("arbitrary",),
            vmem_limit_bytes=vmem_limit),
    )(src2d, wih_t, whh_t, bih, bhh)

    return hidden_nh[:N].reshape(1, N, H)   # (num_layers * num_directions = 1, N, H)


def _reference_gru_hidden(src, w_ih, w_hh, b_ih, b_hh):
    """Plain-numpy reference matching torch.nn.GRU semantics."""
    T, N, C = src.shape
    H = w_hh.shape[1]
    h = np.zeros((N, H), dtype=np.float64)
    src = np.asarray(src, dtype=np.float64)
    w_ih = np.asarray(w_ih, dtype=np.float64)
    w_hh = np.asarray(w_hh, dtype=np.float64)
    b_ih = np.asarray(b_ih, dtype=np.float64)
    b_hh = np.asarray(b_hh, dtype=np.float64)

    def sigm(x):
        return 1.0 / (1.0 + np.exp(-x))

    for t in range(T):
        gi = src[t] @ w_ih.T + b_ih
        gh = h @ w_hh.T + b_hh
        i_r, i_z, i_n = gi[:, :H], gi[:, H:2 * H], gi[:, 2 * H:]
        h_r, h_z, h_n = gh[:, :H], gh[:, H:2 * H], gh[:, 2 * H:]
        r = sigm(i_r + h_r)
        z = sigm(i_z + h_z)
        n = np.tanh(i_n + r * h_n)
        h = (1.0 - z) * n + z * h
    return h[None].astype(np.float32)


if __name__ == "__main__":
    def make_inputs(key, T, N, C, H):
        ks = jax.random.split(key, 5)
        bound = 1.0 / np.sqrt(H)   # PyTorch-style uniform(-1/sqrt(H), 1/sqrt(H))
        src = jax.random.normal(ks[0], (T, N, C), dtype=jnp.float32)
        w_ih = jax.random.uniform(ks[1], (3 * H, C), minval=-bound, maxval=bound, dtype=jnp.float32)
        w_hh = jax.random.uniform(ks[2], (3 * H, H), minval=-bound, maxval=bound, dtype=jnp.float32)
        b_ih = jax.random.uniform(ks[3], (3 * H,), minval=-bound, maxval=bound, dtype=jnp.float32)
        b_hh = jax.random.uniform(ks[4], (3 * H,), minval=-bound, maxval=bound, dtype=jnp.float32)
        return src, w_ih, w_hh, b_ih, b_hh

    key = jax.random.PRNGKey(0)

    # --- Test 1: module demo shape (T=8, N=8, C=32, H=32), default bf16 MXU path ---
    T, N, C, H = 8, 8, 32, 32
    args = make_inputs(key, T, N, C, H)
    ref = _reference_gru_hidden(*[np.asarray(a) for a in args])

    fwd_bf16 = jax.jit(seq_my_encoder_forward)
    hidden = jax.block_until_ready(fwd_bf16(*args))
    assert hidden.shape == (1, N, H)
    np.testing.assert_allclose(np.asarray(hidden), ref, rtol=5e-2, atol=5e-2)

    # --- Test 2: same shape, f32 matmul path, tight parity with the reference ---
    fwd_f32 = jax.jit(lambda *a: seq_my_encoder_forward(*a, matmul_dtype=jnp.float32))
    hidden_f32 = jax.block_until_ready(fwd_f32(*args))
    np.testing.assert_allclose(np.asarray(hidden_f32), ref, rtol=1e-4, atol=1e-4)

    # --- Test 3: N=16 exercises the two-sub-chain split (f32) ---
    T3, N3 = 8, 16
    args3 = make_inputs(jax.random.PRNGKey(1), T3, N3, C, H)
    ref3 = _reference_gru_hidden(*[np.asarray(a) for a in args3])
    hidden3 = jax.block_until_ready(fwd_f32(*args3))
    assert hidden3.shape == (1, N3, H)
    np.testing.assert_allclose(np.asarray(hidden3), ref3, rtol=5e-4, atol=5e-4)

    # --- Test 4: time-chunked grid + odd batch padding (T=32, N=5, chunk=8, f32) ---
    T4, N4 = 32, 5
    args4 = make_inputs(jax.random.PRNGKey(2), T4, N4, C, H)
    ref4 = _reference_gru_hidden(*[np.asarray(a) for a in args4])
    fwd_chunk = jax.jit(lambda *a: seq_my_encoder_forward(
        *a, matmul_dtype=jnp.float32, time_chunk=8))
    hidden4 = jax.block_until_ready(fwd_chunk(*args4))
    assert hidden4.shape == (1, N4, H)
    np.testing.assert_allclose(np.asarray(hidden4), ref4, rtol=1e-3, atol=1e-3)

    print("KERNEL_OK")
</pallas_src>

<mosaic_0001>
module attributes {stable_mosaic.version = 11 : i64} {
  func.func @_gru_kernel(%arg0: i32, %arg1: memref<64x32xf32, #tpu.memory_space<vmem>>, %arg2: memref<32x96xbf16, #tpu.memory_space<vmem>>, %arg3: memref<32x96xbf16, #tpu.memory_space<vmem>>, %arg4: memref<1x96xf32, #tpu.memory_space<vmem>>, %arg5: memref<1x96xf32, #tpu.memory_space<vmem>>, %arg6: memref<8x32xf32, #tpu.memory_space<vmem>>, %arg7: memref<8x32xf32, #tpu.memory_space<vmem>>) attributes {dimension_semantics = [#tpu.dimension_semantics<arbitrary>], iteration_bounds = array<i64: 1>, scalar_prefetch = 0 : i64, scratch_operands = 1 : i64, tpu.core_type = #tpu.core_type<tc>, window_params = [{transform_indices = @transform_0, window_bounds = array<i64: 64, 32>}, {pipeline_mode = #tpu.pipeline_mode<synchronous>, transform_indices = @transform_1, window_bounds = array<i64: 32, 96>}, {pipeline_mode = #tpu.pipeline_mode<synchronous>, transform_indices = @transform_2, window_bounds = array<i64: 32, 96>}, {pipeline_mode = #tpu.pipeline_mode<synchronous>, transform_indices = @transform_3, window_bounds = array<i64: 1, 96>}, {pipeline_mode = #tpu.pipeline_mode<synchronous>, transform_indices = @transform_4, window_bounds = array<i64: 1, 96>}, {pipeline_mode = #tpu.pipeline_mode<synchronous>, transform_indices = @transform_5, window_bounds = array<i64: 8, 32>}]} {
    %c0_i32 = arith.constant 0 : i32
    %0 = arith.cmpi eq, %arg0, %c0_i32 : i32
    %1 = arith.extui %0 : i1 to i32
    %c0_i32_0 = arith.constant 0 : i32
    %2 = arith.cmpi ne, %1, %c0_i32_0 : i32
    scf.if %2 {
      %cst_48 = arith.constant 0.000000e+00 : f32
      %265 = vector.broadcast %cst_48 : f32 to vector<8x32xf32>
      %c0_49 = arith.constant 0 : index
      %c0_50 = arith.constant 0 : index
      %266 = vector.load %arg7[%c0_49, %c0_50] : memref<8x32xf32, #tpu.memory_space<vmem>>, vector<8x32xf32>
      tpu.vector_store %arg7[%c0_49, %c0_50], %265 {strides = array<i32>} : memref<8x32xf32, #tpu.memory_space<vmem>>, vector<8x32xf32>,
    } else {
    }
    %c0 = arith.constant 0 : index
    %c0_1 = arith.constant 0 : index
    %3 = vector.load %arg2[%c0, %c0_1] : memref<32x96xbf16, #tpu.memory_space<vmem>>, vector<32x96xbf16>
    %c0_2 = arith.constant 0 : index
    %c0_3 = arith.constant 0 : index
    %4 = vector.load %arg3[%c0_2, %c0_3] : memref<32x96xbf16, #tpu.memory_space<vmem>>, vector<32x96xbf16>
    %c0_4 = arith.constant 0 : index
    %c0_5 = arith.constant 0 : index
    %5 = vector.load %arg4[%c0_4, %c0_5] : memref<1x96xf32, #tpu.memory_space<vmem>>, vector<1x96xf32>
    %c0_6 = arith.constant 0 : index
    %c0_7 = arith.constant 0 : index
    %6 = vector.load %arg5[%c0_6, %c0_7] : memref<1x96xf32, #tpu.memory_space<vmem>>, vector<1x96xf32>
    %c0_8 = arith.constant 0 : index
    %c0_9 = arith.constant 0 : index
    %7 = vector.load %arg1[%c0_8, %c0_9] : memref<64x32xf32, #tpu.memory_space<vmem>>, vector<64x32xf32>
    %8 = arith.truncf %7 : vector<64x32xf32> to vector<64x32xbf16>
    %cst = arith.constant dense<0.000000e+00> : vector<64x96xf32>
    %9 = tpu.matmul %8, %3, %cst {dimension_numbers = #tpu.dot_dimension_numbers<[1], [0], [0], [1], [0, 0, 1, 1], [], []>} : vector<64x32xbf16>, vector<32x96xbf16>, vector<64x96xf32> -> vector<64x96xf32>
    %10 = vector.broadcast %5 : vector<1x96xf32> to vector<64x96xf32>
    %11 = arith.addf %9, %10 : vector<64x96xf32>
    %c0_10 = arith.constant 0 : index
    %c0_11 = arith.constant 0 : index
    %12 = vector.load %arg7[%c0_10, %c0_11] : memref<8x32xf32, #tpu.memory_space<vmem>>, vector<8x32xf32>
    %13 = vector.extract_strided_slice %11 {offsets = [0, 0], sizes = [8, 96], strides = [1, 1]} : vector<64x96xf32> to vector<8x96xf32>
    %14 = arith.truncf %12 : vector<8x32xf32> to vector<8x32xbf16>
    %cst_12 = arith.constant dense<0.000000e+00> : vector<8x96xf32>
    %15 = tpu.matmul %14, %4, %cst_12 {dimension_numbers = #tpu.dot_dimension_numbers<[1], [0], [0], [1], [0, 0, 1, 1], [], []>} : vector<8x32xbf16>, vector<32x96xbf16>, vector<8x96xf32> -> vector<8x96xf32>
    %16 = vector.broadcast %6 : vector<1x96xf32> to vector<8x96xf32>
    %17 = arith.addf %15, %16 : vector<8x96xf32>
    %18 = vector.extract_strided_slice %13 {offsets = [0, 0], sizes = [8, 32], strides = [1, 1]} : vector<8x96xf32> to vector<8x32xf32>
    %19 = vector.extract_strided_slice %17 {offsets = [0, 0], sizes = [8, 32], strides = [1, 1]} : vector<8x96xf32> to vector<8x32xf32>
    %20 = arith.addf %18, %19 : vector<8x32xf32>
    %21 = arith.negf %20 : vector<8x32xf32>
    %22 = math.exp %21 : vector<8x32xf32>
    %cst_13 = arith.constant 1.000000e+00 : f32
    %23 = vector.broadcast %cst_13 : f32 to vector<8x32xf32>
    %24 = arith.addf %23, %22 : vector<8x32xf32>
    %25 = arith.divf %23, %24 : vector<8x32xf32>
    %26 = vector.extract_strided_slice %13 {offsets = [0, 32], sizes = [8, 32], strides = [1, 1]} : vector<8x96xf32> to vector<8x32xf32>
    %27 = vector.extract_strided_slice %17 {offsets = [0, 32], sizes = [8, 32], strides = [1, 1]} : vector<8x96xf32> to vector<8x32xf32>
    %28 = arith.addf %26, %27 : vector<8x32xf32>
    %29 = arith.negf %28 : vector<8x32xf32>
    %30 = math.exp %29 : vector<8x32xf32>
    %cst_14 = arith.constant 1.000000e+00 : f32
    %31 = vector.broadcast %cst_14 : f32 to vector<8x32xf32>
    %32 = arith.addf %31, %30 : vector<8x32xf32>
    %33 = arith.divf %31, %32 : vector<8x32xf32>
    %34 = vector.extract_strided_slice %13 {offsets = [0, 64], sizes = [8, 32], strides = [1, 1]} : vector<8x96xf32> to vector<8x32xf32>
    %35 = vector.extract_strided_slice %17 {offsets = [0, 64], sizes = [8, 32], strides = [1, 1]} : vector<8x96xf32> to vector<8x32xf32>
    %36 = arith.mulf %25, %35 : vector<8x32xf32>
    %37 = arith.addf %34, %36 : vector<8x32xf32>
    %38 = math.tanh %37 : vector<8x32xf32>
    %cst_15 = arith.constant 1.000000e+00 : f32
    %39 = vector.broadcast %cst_15 : f32 to vector<8x32xf32>
    %40 = arith.subf %39, %33 : vector<8x32xf32>
    %41 = arith.mulf %40, %38 : vector<8x32xf32>
    %42 = arith.mulf %33, %12 : vector<8x32xf32>
    %43 = arith.addf %41, %42 : vector<8x32xf32>
    %44 = vector.extract_strided_slice %11 {offsets = [8, 0], sizes = [8, 96], strides = [1, 1]} : vector<64x96xf32> to vector<8x96xf32>
    %45 = arith.truncf %43 : vector<8x32xf32> to vector<8x32xbf16>
    %cst_16 = arith.constant dense<0.000000e+00> : vector<8x96xf32>
    %46 = tpu.matmul %45, %4, %cst_16 {dimension_numbers = #tpu.dot_dimension_numbers<[1], [0], [0], [1], [0, 0, 1, 1], [], []>} : vector<8x32xbf16>, vector<32x96xbf16>, vector<8x96xf32> -> vector<8x96xf32>
    %47 = vector.broadcast %6 : vector<1x96xf32> to vector<8x96xf32>
    %48 = arith.addf %46, %47 : vector<8x96xf32>
    %49 = vector.extract_strided_slice %44 {offsets = [0, 0], sizes = [8, 32], strides = [1, 1]} : vector<8x96xf32> to vector<8x32xf32>
    %50 = vector.extract_strided_slice %48 {offsets = [0, 0], sizes = [8, 32], strides = [1, 1]} : vector<8x96xf32> to vector<8x32xf32>
    %51 = arith.addf %49, %50 : vector<8x32xf32>
    %52 = arith.negf %51 : vector<8x32xf32>
    %53 = math.exp %52 : vector<8x32xf32>
    %cst_17 = arith.constant 1.000000e+00 : f32
    %54 = vector.broadcast %cst_17 : f32 to vector<8x32xf32>
    %55 = arith.addf %54, %53 : vector<8x32xf32>
    %56 = arith.divf %54, %55 : vector<8x32xf32>
    %57 = vector.extract_strided_slice %44 {offsets = [0, 32], sizes = [8, 32], strides = [1, 1]} : vector<8x96xf32> to vector<8x32xf32>
    %58 = vector.extract_strided_slice %48 {offsets = [0, 32], sizes = [8, 32], strides = [1, 1]} : vector<8x96xf32> to vector<8x32xf32>
    %59 = arith.addf %57, %58 : vector<8x32xf32>
    %60 = arith.negf %59 : vector<8x32xf32>
    %61 = math.exp %60 : vector<8x32xf32>
    %cst_18 = arith.constant 1.000000e+00 : f32
    %62 = vector.broadcast %cst_18 : f32 to vector<8x32xf32>
    %63 = arith.addf %62, %61 : vector<8x32xf32>
    %64 = arith.divf %62, %63 : vector<8x32xf32>
    %65 = vector.extract_strided_slice %44 {offsets = [0, 64], sizes = [8, 32], strides = [1, 1]} : vector<8x96xf32> to vector<8x32xf32>
    %66 = vector.extract_strided_slice %48 {offsets = [0, 64], sizes = [8, 32], strides = [1, 1]} : vector<8x96xf32> to vector<8x32xf32>
    %67 = arith.mulf %56, %66 : vector<8x32xf32>
    %68 = arith.addf %65, %67 : vector<8x32xf32>
    %69 = math.tanh %68 : vector<8x32xf32>
    %cst_19 = arith.constant 1.000000e+00 : f32
    %70 = vector.broadcast %cst_19 : f32 to vector<8x32xf32>
    %71 = arith.subf %70, %64 : vector<8x32xf32>
    %72 = arith.mulf %71, %69 : vector<8x32xf32>
    %73 = arith.mulf %64, %43 : vector<8x32xf32>
    %74 = arith.addf %72, %73 : vector<8x32xf32>
    %75 = vector.extract_strided_slice %11 {offsets = [16, 0], sizes = [8, 96], strides = [1, 1]} : vector<64x96xf32> to vector<8x96xf32>
    %76 = arith.truncf %74 : vector<8x32xf32> to vector<8x32xbf16>
    %cst_20 = arith.constant dense<0.000000e+00> : vector<8x96xf32>
    %77 = tpu.matmul %76, %4, %cst_20 {dimension_numbers = #tpu.dot_dimension_numbers<[1], [0], [0], [1], [0, 0, 1, 1], [], []>} : vector<8x32xbf16>, vector<32x96xbf16>, vector<8x96xf32> -> vector<8x96xf32>
    %78 = vector.broadcast %6 : vector<1x96xf32> to vector<8x96xf32>
    %79 = arith.addf %77, %78 : vector<8x96xf32>
    %80 = vector.extract_strided_slice %75 {offsets = [0, 0], sizes = [8, 32], strides = [1, 1]} : vector<8x96xf32> to vector<8x32xf32>
    %81 = vector.extract_strided_slice %79 {offsets = [0, 0], sizes = [8, 32], strides = [1, 1]} : vector<8x96xf32> to vector<8x32xf32>
    %82 = arith.addf %80, %81 : vector<8x32xf32>
    %83 = arith.negf %82 : vector<8x32xf32>
    %84 = math.exp %83 : vector<8x32xf32>
    %cst_21 = arith.constant 1.000000e+00 : f32
    %85 = vector.broadcast %cst_21 : f32 to vector<8x32xf32>
    %86 = arith.addf %85, %84 : vector<8x32xf32>
    %87 = arith.divf %85, %86 : vector<8x32xf32>
    %88 = vector.extract_strided_slice %75 {offsets = [0, 32], sizes = [8, 32], strides = [1, 1]} : vector<8x96xf32> to vector<8x32xf32>
    %89 = vector.extract_strided_slice %79 {offsets = [0, 32], sizes = [8, 32], strides = [1, 1]} : vector<8x96xf32> to vector<8x32xf32>
    %90 = arith.addf %88, %89 : vector<8x32xf32>
    %91 = arith.negf %90 : vector<8x32xf32>
    %92 = math.exp %91 : vector<8x32xf32>
    %cst_22 = arith.constant 1.000000e+00 : f32
    %93 = vector.broadcast %cst_22 : f32 to vector<8x32xf32>
    %94 = arith.addf %93, %92 : vector<8x32xf32>
    %95 = arith.divf %93, %94 : vector<8x32xf32>
    %96 = vector.extract_strided_slice %75 {offsets = [0, 64], sizes = [8, 32], strides = [1, 1]} : vector<8x96xf32> to vector<8x32xf32>
    %97 = vector.extract_strided_slice %79 {offsets = [0, 64], sizes = [8, 32], strides = [1, 1]} : vector<8x96xf32> to vector<8x32xf32>
    %98 = arith.mulf %87, %97 : vector<8x32xf32>
    %99 = arith.addf %96, %98 : vector<8x32xf32>
    %100 = math.tanh %99 : vector<8x32xf32>
    %cst_23 = arith.constant 1.000000e+00 : f32
    %101 = vector.broadcast %cst_23 : f32 to vector<8x32xf32>
    %102 = arith.subf %101, %95 : vector<8x32xf32>
    %103 = arith.mulf %102, %100 : vector<8x32xf32>
    %104 = arith.mulf %95, %74 : vector<8x32xf32>
    %105 = arith.addf %103, %104 : vector<8x32xf32>
    %106 = vector.extract_strided_slice %11 {offsets = [24, 0], sizes = [8, 96], strides = [1, 1]} : vector<64x96xf32> to vector<8x96xf32>
    %107 = arith.truncf %105 : vector<8x32xf32> to vector<8x32xbf16>
    %cst_24 = arith.constant dense<0.000000e+00> : vector<8x96xf32>
    %108 = tpu.matmul %107, %4, %cst_24 {dimension_numbers = #tpu.dot_dimension_numbers<[1], [0], [0], [1], [0, 0, 1, 1], [], []>} : vector<8x32xbf16>, vector<32x96xbf16>, vector<8x96xf32> -> vector<8x96xf32>
    %109 = vector.broadcast %6 : vector<1x96xf32> to vector<8x96xf32>
    %110 = arith.addf %108, %109 : vector<8x96xf32>
    %111 = vector.extract_strided_slice %106 {offsets = [0, 0], sizes = [8, 32], strides = [1, 1]} : vector<8x96xf32> to vector<8x32xf32>
    %112 = vector.extract_strided_slice %110 {offsets = [0, 0], sizes = [8, 32], strides = [1, 1]} : vector<8x96xf32> to vector<8x32xf32>
    %113 = arith.addf %111, %112 : vector<8x32xf32>
    %114 = arith.negf %113 : vector<8x32xf32>
    %115 = math.exp %114 : vector<8x32xf32>
    %cst_25 = arith.constant 1.000000e+00 : f32
    %116 = vector.broadcast %cst_25 : f32 to vector<8x32xf32>
    %117 = arith.addf %116, %115 : vector<8x32xf32>
    %118 = arith.divf %116, %117 : vector<8x32xf32>
    %119 = vector.extract_strided_slice %106 {offsets = [0, 32], sizes = [8, 32], strides = [1, 1]} : vector<8x96xf32> to vector<8x32xf32>
    %120 = vector.extract_strided_slice %110 {offsets = [0, 32], sizes = [8, 32], strides = [1, 1]} : vector<8x96xf32> to vector<8x32xf32>
    %121 = arith.addf %119, %120 : vector<8x32xf32>
    %122 = arith.negf %121 : vector<8x32xf32>
    %123 = math.exp %122 : vector<8x32xf32>
    %cst_26 = arith.constant 1.000000e+00 : f32
    %124 = vector.broadcast %cst_26 : f32 to vector<8x32xf32>
    %125 = arith.addf %124, %123 : vector<8x32xf32>
    %126 = arith.divf %124, %125 : vector<8x32xf32>
    %127 = vector.extract_strided_slice %106 {offsets = [0, 64], sizes = [8, 32], strides = [1, 1]} : vector<8x96xf32> to vector<8x32xf32>
    %128 = vector.extract_strided_slice %110 {offsets = [0, 64], sizes = [8, 32], strides = [1, 1]} : vector<8x96xf32> to vector<8x32xf32>
    %129 = arith.mulf %118, %128 : vector<8x32xf32>
    %130 = arith.addf %127, %129 : vector<8x32xf32>
    %131 = math.tanh %130 : vector<8x32xf32>
    %cst_27 = arith.constant 1.000000e+00 : f32
    %132 = vector.broadcast %cst_27 : f32 to vector<8x32xf32>
    %133 = arith.subf %132, %126 : vector<8x32xf32>
    %134 = arith.mulf %133, %131 : vector<8x32xf32>
    %135 = arith.mulf %126, %105 : vector<8x32xf32>
    %136 = arith.addf %134, %135 : vector<8x32xf32>
    %137 = vector.extract_strided_slice %11 {offsets = [32, 0], sizes = [8, 96], strides = [1, 1]} : vector<64x96xf32> to vector<8x96xf32>
    %138 = arith.truncf %136 : vector<8x32xf32> to vector<8x32xbf16>
    %cst_28 = arith.constant dense<0.000000e+00> : vector<8x96xf32>
    %139 = tpu.matmul %138, %4, %cst_28 {dimension_numbers = #tpu.dot_dimension_numbers<[1], [0], [0], [1], [0, 0, 1, 1], [], []>} : vector<8x32xbf16>, vector<32x96xbf16>, vector<8x96xf32> -> vector<8x96xf32>
    %140 = vector.broadcast %6 : vector<1x96xf32> to vector<8x96xf32>
    %141 = arith.addf %139, %140 : vector<8x96xf32>
    %142 = vector.extract_strided_slice %137 {offsets = [0, 0], sizes = [8, 32], strides = [1, 1]} : vector<8x96xf32> to vector<8x32xf32>
    %143 = vector.extract_strided_slice %141 {offsets = [0, 0], sizes = [8, 32], strides = [1, 1]} : vector<8x96xf32> to vector<8x32xf32>
    %144 = arith.addf %142, %143 : vector<8x32xf32>
    %145 = arith.negf %144 : vector<8x32xf32>
    %146 = math.exp %145 : vector<8x32xf32>
    %cst_29 = arith.constant 1.000000e+00 : f32
    %147 = vector.broadcast %cst_29 : f32 to vector<8x32xf32>
    %148 = arith.addf %147, %146 : vector<8x32xf32>
    %149 = arith.divf %147, %148 : vector<8x32xf32>
    %150 = vector.extract_strided_slice %137 {offsets = [0, 32], sizes = [8, 32], strides = [1, 1]} : vector<8x96xf32> to vector<8x32xf32>
    %151 = vector.extract_strided_slice %141 {offsets = [0, 32], sizes = [8, 32], strides = [1, 1]} : vector<8x96xf32> to vector<8x32xf32>
    %152 = arith.addf %150, %151 : vector<8x32xf32>
    %153 = arith.negf %152 : vector<8x32xf32>
    %154 = math.exp %153 : vector<8x32xf32>
    %cst_30 = arith.constant 1.000000e+00 : f32
    %155 = vector.broadcast %cst_30 : f32 to vector<8x32xf32>
    %156 = arith.addf %155, %154 : vector<8x32xf32>
    %157 = arith.divf %155, %156 : vector<8x32xf32>
    %158 = vector.extract_strided_slice %137 {offsets = [0, 64], sizes = [8, 32], strides = [1, 1]} : vector<8x96xf32> to vector<8x32xf32>
    %159 = vector.extract_strided_slice %141 {offsets = [0, 64], sizes = [8, 32], strides = [1, 1]} : vector<8x96xf32> to vector<8x32xf32>
    %160 = arith.mulf %149, %159 : vector<8x32xf32>
    %161 = arith.addf %158, %160 : vector<8x32xf32>
    %162 = math.tanh %161 : vector<8x32xf32>
    %cst_31 = arith.constant 1.000000e+00 : f32
    %163 = vector.broadcast %cst_31 : f32 to vector<8x32xf32>
    %164 = arith.subf %163, %157 : vector<8x32xf32>
    %165 = arith.mulf %164, %162 : vector<8x32xf32>
    %166 = arith.mulf %157, %136 : vector<8x32xf32>
    %167 = arith.addf %165, %166 : vector<8x32xf32>
    %168 = vector.extract_strided_slice %11 {offsets = [40, 0], sizes = [8, 96], strides = [1, 1]} : vector<64x96xf32> to vector<8x96xf32>
    %169 = arith.truncf %167 : vector<8x32xf32> to vector<8x32xbf16>
    %cst_32 = arith.constant dense<0.000000e+00> : vector<8x96xf32>
    %170 = tpu.matmul %169, %4, %cst_32 {dimension_numbers = #tpu.dot_dimension_numbers<[1], [0], [0], [1], [0, 0, 1, 1], [], []>} : vector<8x32xbf16>, vector<32x96xbf16>, vector<8x96xf32> -> vector<8x96xf32>
    %171 = vector.broadcast %6 : vector<1x96xf32> to vector<8x96xf32>
    %172 = arith.addf %170, %171 : vector<8x96xf32>
    %173 = vector.extract_strided_slice %168 {offsets = [0, 0], sizes = [8, 32], strides = [1, 1]} : vector<8x96xf32> to vector<8x32xf32>
    %174 = vector.extract_strided_slice %172 {offsets = [0, 0], sizes = [8, 32], strides = [1, 1]} : vector<8x96xf32> to vector<8x32xf32>
    %175 = arith.addf %173, %174 : vector<8x32xf32>
    %176 = arith.negf %175 : vector<8x32xf32>
    %177 = math.exp %176 : vector<8x32xf32>
    %cst_33 = arith.constant 1.000000e+00 : f32
    %178 = vector.broadcast %cst_33 : f32 to vector<8x32xf32>
    %179 = arith.addf %178, %177 : vector<8x32xf32>
    %180 = arith.divf %178, %179 : vector<8x32xf32>
    %181 = vector.extract_strided_slice %168 {offsets = [0, 32], sizes = [8, 32], strides = [1, 1]} : vector<8x96xf32> to vector<8x32xf32>
    %182 = vector.extract_strided_slice %172 {offsets = [0, 32], sizes = [8, 32], strides = [1, 1]} : vector<8x96xf32> to vector<8x32xf32>
    %183 = arith.addf %181, %182 : vector<8x32xf32>
    %184 = arith.negf %183 : vector<8x32xf32>
    %185 = math.exp %184 : vector<8x32xf32>
    %cst_34 = arith.constant 1.000000e+00 : f32
    %186 = vector.broadcast %cst_34 : f32 to vector<8x32xf32>
    %187 = arith.addf %186, %185 : vector<8x32xf32>
    %188 = arith.divf %186, %187 : vector<8x32xf32>
    %189 = vector.extract_strided_slice %168 {offsets = [0, 64], sizes = [8, 32], strides = [1, 1]} : vector<8x96xf32> to vector<8x32xf32>
    %190 = vector.extract_strided_slice %172 {offsets = [0, 64], sizes = [8, 32], strides = [1, 1]} : vector<8x96xf32> to vector<8x32xf32>
    %191 = arith.mulf %180, %190 : vector<8x32xf32>
    %192 = arith.addf %189, %191 : vector<8x32xf32>
    %193 = math.tanh %192 : vector<8x32xf32>
    %cst_35 = arith.constant 1.000000e+00 : f32
    %194 = vector.broadcast %cst_35 : f32 to vector<8x32xf32>
    %195 = arith.subf %194, %188 : vector<8x32xf32>
    %196 = arith.mulf %195, %193 : vector<8x32xf32>
    %197 = arith.mulf %188, %167 : vector<8x32xf32>
    %198 = arith.addf %196, %197 : vector<8x32xf32>
    %199 = vector.extract_strided_slice %11 {offsets = [48, 0], sizes = [8, 96], strides = [1, 1]} : vector<64x96xf32> to vector<8x96xf32>
    %200 = arith.truncf %198 : vector<8x32xf32> to vector<8x32xbf16>
    %cst_36 = arith.constant dense<0.000000e+00> : vector<8x96xf32>
    %201 = tpu.matmul %200, %4, %cst_36 {dimension_numbers = #tpu.dot_dimension_numbers<[1], [0], [0], [1], [0, 0, 1, 1], [], []>} : vector<8x32xbf16>, vector<32x96xbf16>, vector<8x96xf32> -> vector<8x96xf32>
    %202 = vector.broadcast %6 : vector<1x96xf32> to vector<8x96xf32>
    %203 = arith.addf %201, %202 : vector<8x96xf32>
    %204 = vector.extract_strided_slice %199 {offsets = [0, 0], sizes = [8, 32], strides = [1, 1]} : vector<8x96xf32> to vector<8x32xf32>
    %205 = vector.extract_strided_slice %203 {offsets = [0, 0], sizes = [8, 32], strides = [1, 1]} : vector<8x96xf32> to vector<8x32xf32>
    %206 = arith.addf %204, %205 : vector<8x32xf32>
    %207 = arith.negf %206 : vector<8x32xf32>
    %208 = math.exp %207 : vector<8x32xf32>
    %cst_37 = arith.constant 1.000000e+00 : f32
    %209 = vector.broadcast %cst_37 : f32 to vector<8x32xf32>
    %210 = arith.addf %209, %208 : vector<8x32xf32>
    %211 = arith.divf %209, %210 : vector<8x32xf32>
    %212 = vector.extract_strided_slice %199 {offsets = [0, 32], sizes = [8, 32], strides = [1, 1]} : vector<8x96xf32> to vector<8x32xf32>
    %213 = vector.extract_strided_slice %203 {offsets = [0, 32], sizes = [8, 32], strides = [1, 1]} : vector<8x96xf32> to vector<8x32xf32>
    %214 = arith.addf %212, %213 : vector<8x32xf32>
    %215 = arith.negf %214 : vector<8x32xf32>
    %216 = math.exp %215 : vector<8x32xf32>
    %cst_38 = arith.constant 1.000000e+00 : f32
    %217 = vector.broadcast %cst_38 : f32 to vector<8x32xf32>
    %218 = arith.addf %217, %216 : vector<8x32xf32>
    %219 = arith.divf %217, %218 : vector<8x32xf32>
    %220 = vector.extract_strided_slice %199 {offsets = [0, 64], sizes = [8, 32], strides = [1, 1]} : vector<8x96xf32> to vector<8x32xf32>
    %221 = vector.extract_strided_slice %203 {offsets = [0, 64], sizes = [8, 32], strides = [1, 1]} : vector<8x96xf32> to vector<8x32xf32>
    %222 = arith.mulf %211, %221 : vector<8x32xf32>
    %223 = arith.addf %220, %222 : vector<8x32xf32>
    %224 = math.tanh %223 : vector<8x32xf32>
    %cst_39 = arith.constant 1.000000e+00 : f32
    %225 = vector.broadcast %cst_39 : f32 to vector<8x32xf32>
    %226 = arith.subf %225, %219 : vector<8x32xf32>
    %227 = arith.mulf %226, %224 : vector<8x32xf32>
    %228 = arith.mulf %219, %198 : vector<8x32xf32>
    %229 = arith.addf %227, %228 : vector<8x32xf32>
    %230 = vector.extract_strided_slice %11 {offsets = [56, 0], sizes = [8, 96], strides = [1, 1]} : vector<64x96xf32> to vector<8x96xf32>
    %231 = arith.truncf %229 : vector<8x32xf32> to vector<8x32xbf16>
    %cst_40 = arith.constant dense<0.000000e+00> : vector<8x96xf32>
    %232 = tpu.matmul %231, %4, %cst_40 {dimension_numbers = #tpu.dot_dimension_numbers<[1], [0], [0], [1], [0, 0, 1, 1], [], []>} : vector<8x32xbf16>, vector<32x96xbf16>, vector<8x96xf32> -> vector<8x96xf32>
    %233 = vector.broadcast %6 : vector<1x96xf32> to vector<8x96xf32>
    %234 = arith.addf %232, %233 : vector<8x96xf32>
    %235 = vector.extract_strided_slice %230 {offsets = [0, 0], sizes = [8, 32], strides = [1, 1]} : vector<8x96xf32> to vector<8x32xf32>
    %236 = vector.extract_strided_slice %234 {offsets = [0, 0], sizes = [8, 32], strides = [1, 1]} : vector<8x96xf32> to vector<8x32xf32>
    %237 = arith.addf %235, %236 : vector<8x32xf32>
    %238 = arith.negf %237 : vector<8x32xf32>
    %239 = math.exp %238 : vector<8x32xf32>
    %cst_41 = arith.constant 1.000000e+00 : f32
    %240 = vector.broadcast %cst_41 : f32 to vector<8x32xf32>
    %241 = arith.addf %240, %239 : vector<8x32xf32>
    %242 = arith.divf %240, %241 : vector<8x32xf32>
    %243 = vector.extract_strided_slice %230 {offsets = [0, 32], sizes = [8, 32], strides = [1, 1]} : vector<8x96xf32> to vector<8x32xf32>
    %244 = vector.extract_strided_slice %234 {offsets = [0, 32], sizes = [8, 32], strides = [1, 1]} : vector<8x96xf32> to vector<8x32xf32>
    %245 = arith.addf %243, %244 : vector<8x32xf32>
    %246 = arith.negf %245 : vector<8x32xf32>
    %247 = math.exp %246 : vector<8x32xf32>
    %cst_42 = arith.constant 1.000000e+00 : f32
    %248 = vector.broadcast %cst_42 : f32 to vector<8x32xf32>
    %249 = arith.addf %248, %247 : vector<8x32xf32>
    %250 = arith.divf %248, %249 : vector<8x32xf32>
    %251 = vector.extract_strided_slice %230 {offsets = [0, 64], sizes = [8, 32], strides = [1, 1]} : vector<8x96xf32> to vector<8x32xf32>
    %252 = vector.extract_strided_slice %234 {offsets = [0, 64], sizes = [8, 32], strides = [1, 1]} : vector<8x96xf32> to vector<8x32xf32>
    %253 = arith.mulf %242, %252 : vector<8x32xf32>
    %254 = arith.addf %251, %253 : vector<8x32xf32>
    %255 = math.tanh %254 : vector<8x32xf32>
    %cst_43 = arith.constant 1.000000e+00 : f32
    %256 = vector.broadcast %cst_43 : f32 to vector<8x32xf32>
    %257 = arith.subf %256, %250 : vector<8x32xf32>
    %258 = arith.mulf %257, %255 : vector<8x32xf32>
    %259 = arith.mulf %250, %229 : vector<8x32xf32>
    %260 = arith.addf %258, %259 : vector<8x32xf32>
    %c0_44 = arith.constant 0 : index
    %c0_45 = arith.constant 0 : index
    %261 = vector.load %arg7[%c0_44, %c0_45] : memref<8x32xf32, #tpu.memory_space<vmem>>, vector<8x32xf32>
    tpu.vector_store %arg7[%c0_44, %c0_45], %260 {strides = array<i32>} : memref<8x32xf32, #tpu.memory_space<vmem>>, vector<8x32xf32>,
    %c0_i32_46 = arith.constant 0 : i32
    %262 = arith.cmpi eq, %arg0, %c0_i32_46 : i32
    %263 = arith.extui %262 : i1 to i32
    %c0_i32_47 = arith.constant 0 : i32
    %264 = arith.cmpi ne, %263, %c0_i32_47 : i32
    scf.if %264 {
      %c0_48 = arith.constant 0 : index
      %c0_49 = arith.constant 0 : index
      %265 = vector.load %arg6[%c0_48, %c0_49] : memref<8x32xf32, #tpu.memory_space<vmem>>, vector<8x32xf32>
      tpu.vector_store %arg6[%c0_48, %c0_49], %260 {strides = array<i32>} : memref<8x32xf32, #tpu.memory_space<vmem>>, vector<8x32xf32>,
    } else {
    }
    return
  }
  func.func @transform_0(%arg0: i32) -> (i32, i32) {
    %c0_i32 = arith.constant 0 : i32
    %c0_i32_0 = arith.constant 0 : i32
    return %arg0, %c0_i32 : i32, i32
  }
  func.func @transform_1(%arg0: i32) -> (i32, i32) {
    %c0_i32 = arith.constant 0 : i32
    %c0_i32_0 = arith.constant 0 : i32
    %c0_i32_1 = arith.constant 0 : i32
    return %c0_i32, %c0_i32_0 : i32, i32
  }
  func.func @transform_2(%arg0: i32) -> (i32, i32) {
    %c0_i32 = arith.constant 0 : i32
    %c0_i32_0 = arith.constant 0 : i32
    %c0_i32_1 = arith.constant 0 : i32
    return %c0_i32, %c0_i32_0 : i32, i32
  }
  func.func @transform_3(%arg0: i32) -> (i32, i32) {
    %c0_i32 = arith.constant 0 : i32
    %c0_i32_0 = arith.constant 0 : i32
    %c0_i32_1 = arith.constant 0 : i32
    return %c0_i32, %c0_i32_0 : i32, i32
  }
  func.func @transform_4(%arg0: i32) -> (i32, i32) {
    %c0_i32 = arith.constant 0 : i32
    %c0_i32_0 = arith.constant 0 : i32
    %c0_i32_1 = arith.constant 0 : i32
    return %c0_i32, %c0_i32_0 : i32, i32
  }
  func.func @transform_5(%arg0: i32) -> (i32, i32) {
    %c0_i32 = arith.constant 0 : i32
    %c0_i32_0 = arith.constant 0 : i32
    %c0_i32_1 = arith.constant 0 : i32
    return %c0_i32, %c0_i32_0 : i32, i32
  }
}

</mosaic_0001>

<llo_original>
// kernel: seq_my_encoder_forward.1
$region0: #{seq_my_encoder_forward.1}
  #allocation0 [shape = 'u32[]', space=smem, size = 0x4, offset = 0x4, fixed_abs, tag = 'smem constant byte address 0x4 - core index']
  #allocation1 [shape = 'u32[144,128]{1,0:T(1,128)}', space=vmem, size = 0x12000, scoped, tag = 'internal scratch']
  #allocation2 [shape = 'f32[8,32]{1,0:T(8,128)}', space=vmem, size = 0x1000, scoped, tag = 'scratch operand']
  %s0 = inlined_call_operand.vmem [shape: f32[64,32], index: 0, kind: input, shape index: {}]
  %s1 = inlined_call_operand.vmem [shape: bf16[32,96], index: 1, kind: input, shape index: {}]
  %s2 = inlined_call_operand.vmem [shape: bf16[32,96], index: 2, kind: input, shape index: {}]
  %s3 = inlined_call_operand.vmem [shape: f32[1,96], index: 3, kind: input, shape index: {}]
  %s4 = inlined_call_operand.vmem [shape: f32[1,96], index: 4, kind: input, shape index: {}]
  %s5 = inlined_call_operand.hbm [shape: f32[8,32], index: 5, kind: output, shape index: {}]
  %s6 = sld [smem:[#allocation0]]
  $region38: #{seq_my_encoder_forward.1} parent=0
    _
  %s8 = ssub.s32 1, %s6
  %s9 = scalar_select 0, %s8, %s6
  $region1: #{seq_my_encoder_forward.1} parent=0
    #allocation3 [shape = 'u8[4096]{0}', space=vmem, size = 0x1000, scoped, tag = 'output window, operand 0, single buffered']
    #allocation4 [shape = 's32[1]{0}', space=sflag, size = 0x4, scoped, tag = 'scoped memory for seq_my_encoder_forward.1']
    %10 = vsyncpa [#allocation4], 0
    // Predicated region
    $region2: #{seq_my_encoder_forward.1} parent=1 // pred_check
      _
    $region3: #{seq_my_encoder_forward.1} parent=1 // pred_check_branch
      %12 = sbr.rel (0) target = $region5
    $region4: #{seq_my_encoder_forward.1} parent=1 // pred_region
      _
    $region5: #{seq_my_encoder_forward.1} parent=1 // pred_fallthru
      _
    // Predicated region
    $region6: #{seq_my_encoder_forward.1} parent=1 // pred_check
      _
    $region7: #{seq_my_encoder_forward.1} parent=1 // pred_check_branch
      %14 = sbr.rel (0) target = $region9
    $region8: #{seq_my_encoder_forward.1} parent=1 // pred_region
      _
    $region9: #{seq_my_encoder_forward.1} parent=1 // pred_fallthru
      _
    // Predicated region
    $region10: #{seq_my_encoder_forward.1} parent=1 // pred_check
      _
    $region11: #{seq_my_encoder_forward.1} parent=1 // pred_check_branch
      %16 = sbr.rel (0) target = $region13
    $region12: #{seq_my_encoder_forward.1} parent=1 // pred_region
      _
    $region13: #{seq_my_encoder_forward.1} parent=1 // pred_fallthru
      _
    // Predicated region
    $region14: #{seq_my_encoder_forward.1} parent=1 // pred_check
      _
    $region15: #{seq_my_encoder_forward.1} parent=1 // pred_check_branch
      %18 = sbr.rel (0) target = $region17
    $region16: #{seq_my_encoder_forward.1} parent=1 // pred_region
      _
    $region17: #{seq_my_encoder_forward.1} parent=1 // pred_fallthru
      _
    // Predicated region
    $region18: #{seq_my_encoder_forward.1} parent=1 // pred_check
      _
    $region19: #{seq_my_encoder_forward.1} parent=1 // pred_check_branch
      %20 = sbr.rel (0) target = $region21
    $region20: #{seq_my_encoder_forward.1} parent=1 // pred_region
      _
    $region21: #{seq_my_encoder_forward.1} parent=1 // pred_fallthru
      _
    %p22 = scmp.eq.s32.totalorder 0, 0
    // Predicated region
    $region22: #{seq_my_encoder_forward.1} parent=1 // pred_check
      %p23 = pneg %p22
    $region23: #{seq_my_encoder_forward.1} parent=1 // pred_check_branch
      %25 = sbr.rel (%p23) target = $region25
    $region24: #{seq_my_encoder_forward.1} parent=1 // pred_region
      %vm26 = vcmask 261120
      %27 = vst.msk [vmem:[#allocation2] sm:$0xff] %vm26, 0.0
    $region25: #{seq_my_encoder_forward.1} parent=1 // pred_fallthru
      _
    %v28 = vld [vmem:[%s1] sm:$0xf]
    %v29 = vld [vmem:[%s1 + $0x4] sm:$0xf]
    %v30 = vld [vmem:[%s1 + $0x8] sm:$0xf]
    %v31 = vld [vmem:[%s1 + $0xc] sm:$0xf]
    %v32 = vld [vmem:[%s2] sm:$0xf]
    %v33 = vld [vmem:[%s2 + $0x4] sm:$0xf]
    %v34 = vld [vmem:[%s2 + $0x8] sm:$0xf]
    %v35 = vld [vmem:[%s2 + $0xc] sm:$0xf]
    %v36 = vld [vmem:[%s3] sm:$0x1]
    %v37 = vld [vmem:[%s4] sm:$0x1]
    %v38 = vld [vmem:[%s0] sm:$0xff]
    %v39 = vld [vmem:[%s0 + $0x8] sm:$0xff]
    %v40 = vld [vmem:[%s0 + $0x10] sm:$0xff]
    %v41 = vld [vmem:[%s0 + $0x18] sm:$0xff]
    %v42 = vld [vmem:[%s0 + $0x20] sm:$0xff]
    %v43 = vld [vmem:[%s0 + $0x28] sm:$0xff]
    %v44 = vld [vmem:[%s0 + $0x30] sm:$0xff]
    %v45 = vld [vmem:[%s0 + $0x38] sm:$0xff]
    %v46 = vpack.c.bf16 %v39, %v38
    %v47 = vpack.c.bf16 %v41, %v40
    %v48 = vpack.c.bf16 %v43, %v42
    %v49 = vpack.c.bf16 %v45, %v44
    %v51 = vlaneseq
    %v52 = vshrl.u32 %v51, 7
    %v53 = vsub.s32 0, %v52
    %v54 = vrot.slane %v36, %v53
    %v60 = vunpack.c.l.b16 %v28
    %v61 = vunpack.c.l.b16 %v29
    %v62 = vunpack.c.l.b16 %v30
    %v63 = vunpack.c.l.b16 %v31
    %v64 = vpack.c.b16 %v61, %v60
    %v65 = vpack.c.b16 %v63, %v62
    %vm68 = vcmask 261120
    %v70 = vsel %vm68, %v46, 0
    %v73 = vsel %vm68, %v47, 0
    %v76 = vsel %vm68, %v48, 0
    %v79 = vsel %vm68, %v49, 0
    %81 = vmatprep.subr.bf16.mxu0 0
    %82 = vmatpush1.bf16.msra.mxu0 %v64
    %83 = vmatprep.subr.bf16.mxu0 0
    %84 = vmatpush1.bf16.msra.mxu0 %v65
    %85 = vmatprep.subr.bf16.mxu0 0
    %86 = vmatpush1.bf16.msra.mxu0 0
    %87 = vmatprep.subr.bf16.mxu0 0
    %88 = vmatpush1.bf16.msra.mxu0 0
    %89 = vmatprep.subr.bf16.mxu0 0
    %90 = vmatpush1.bf16.msra.mxu0 0
    %91 = vmatprep.subr.bf16.mxu0 0
    %92 = vmatpush1.bf16.msra.mxu0 0
    %93 = vmatprep.subr.bf16.mxu0 0
    %94 = vmatpush1.bf16.msra.mxu0 0
    %95 = vmatprep.subr.bf16.mxu0 0
    %96 = vmatpush1.bf16.msra.mxu0 0
    %97 = vmatprep.subr.bf16.mxu0 0
    %98 = vmatpush1.bf16.msra.mxu0 0
    %99 = vmatprep.subr.bf16.mxu0 0
    %100 = vmatpush1.bf16.msra.mxu0 0
    %101 = vmatprep.subr.bf16.mxu0 0
    %102 = vmatpush1.bf16.msra.mxu0 0
    %103 = vmatprep.subr.bf16.mxu0 0
    %104 = vmatpush1.bf16.msra.mxu0 0
    %105 = vmatprep.subr.bf16.mxu0 0
    %106 = vmatpush1.bf16.msra.mxu0 0
    %107 = vmatprep.subr.bf16.mxu0 0
    %108 = vmatpush1.bf16.msra.mxu0 0
    %109 = vmatprep.subr.bf16.mxu0 0
    %110 = vmatpush1.bf16.msra.mxu0 0
    %111 = vmatprep.subr.bf16.mxu0 0
    %112 = vmatpush1.bf16.msra.mxu0 0
    %113 = vmatprep.mubr.bf16.mxu0 0
    %114 = vmatmul.mubr.bf16.gmra.mrb[0].mxu0 %v70
    %v115 = vpop.f32.mrb[0].mxu0
    %v116 = vadd.f32 %v54, %v115
    %v117 = vpop.f32.mrb[0].mxu0
    %v118 = vpop.f32.mrb[0].mxu0
    %v119 = vadd.f32 %v54, %v118
    %v120 = vpop.f32.mrb[0].mxu0
    %121 = vmatprep.mubr.bf16.mxu0 0
    %122 = vmatmul.mubr.bf16.gmra.mrb[0].mxu0 %v73
    %v123 = vpop.f32.mrb[0].mxu0
    %v124 = vadd.f32 %v54, %v123
    %v125 = vpop.f32.mrb[0].mxu0
    %v126 = vpop.f32.mrb[0].mxu0
    %v127 = vadd.f32 %v54, %v126
    %v128 = vpop.f32.mrb[0].mxu0
    %129 = vmatprep.mubr.bf16.mxu0 0
    %130 = vmatmul.mubr.bf16.gmra.mrb[0].mxu0 %v76
    %v131 = vpop.f32.mrb[0].mxu0
    %v132 = vadd.f32 %v54, %v131
    %v133 = vpop.f32.mrb[0].mxu0
    %v134 = vpop.f32.mrb[0].mxu0
    %v135 = vadd.f32 %v54, %v134
    %v136 = vpop.f32.mrb[0].mxu0
    %137 = vmatprep.mubr.bf16.mxu0 0
    %138 = vmatmul.mubr.bf16.gmra.mrb[0].mxu0 %v79
    %v139 = vpop.f32.mrb[0].mxu0
    %v140 = vadd.f32 %v54, %v139
    %v141 = vpop.f32.mrb[0].mxu0
    %v142 = vpop.f32.mrb[0].mxu0
    %v143 = vadd.f32 %v54, %v142
    %v144 = vpop.f32.mrb[0].mxu0
    %145 = vdwg.mxu0
    %v146 = vld [vmem:[#allocation2] sm:$0xff]
    %v147 = vpack.c.bf16 %v146, %v146
    %v149 = vlaneseq
    %v150 = vshrl.u32 %v149, 7
    %v151 = vsub.s32 0, %v150
    %v152 = vrot.slane %v37, %v151
    %v158 = vunpack.c.l.b16 %v32
    %v159 = vunpack.c.l.b16 %v33
    %v160 = vunpack.c.l.b16 %v34
    %v161 = vunpack.c.l.b16 %v35
    %v162 = vpack.c.b16 %v159, %v158
    %v163 = vpack.c.b16 %v161, %v160
    %v167 = vsel %vm68, %v147, 0
    %169 = vmatprep.subr.bf16.mxu0 0
    %170 = vmatpush1.bf16.msra.mxu0 %v162
    %171 = vmatprep.subr.bf16.mxu0 0
    %172 = vmatpush1.bf16.msra.mxu0 %v163
    %173 = vmatprep.subr.bf16.mxu0 0
    %174 = vmatpush1.bf16.msra.mxu0 0
    %175 = vmatprep.subr.bf16.mxu0 0
    %176 = vmatpush1.bf16.msra.mxu0 0
    %177 = vmatprep.subr.bf16.mxu0 0
    %178 = vmatpush1.bf16.msra.mxu0 0
    %179 = vmatprep.subr.bf16.mxu0 0
    %180 = vmatpush1.bf16.msra.mxu0 0
    %181 = vmatprep.subr.bf16.mxu0 0
    %182 = vmatpush1.bf16.msra.mxu0 0
    %183 = vmatprep.subr.bf16.mxu0 0
    %184 = vmatpush1.bf16.msra.mxu0 0
    %185 = vmatprep.subr.bf16.mxu0 0
    %186 = vmatpush1.bf16.msra.mxu0 0
    %187 = vmatprep.subr.bf16.mxu0 0
    %188 = vmatpush1.bf16.msra.mxu0 0
    %189 = vmatprep.subr.bf16.mxu0 0
    %190 = vmatpush1.bf16.msra.mxu0 0
    %191 = vmatprep.subr.bf16.mxu0 0
    %192 = vmatpush1.bf16.msra.mxu0 0
    %193 = vmatprep.subr.bf16.mxu0 0
    %194 = vmatpush1.bf16.msra.mxu0 0
    %195 = vmatprep.subr.bf16.mxu0 0
    %196 = vmatpush1.bf16.msra.mxu0 0
    %197 = vmatprep.subr.bf16.mxu0 0
    %198 = vmatpush1.bf16.msra.mxu0 0
    %199 = vmatprep.subr.bf16.mxu0 0
    %200 = vmatpush1.bf16.msra.mxu0 0
    %201 = vmatprep.mubr.bf16.mxu0 0
    %202 = vmatmul.mubr.bf16.gmra.mrb[0].mxu0 %v167
    %v203 = vpop.f32.mrb[0].mxu0
    %v204 = vadd.f32 %v152, %v203
    %v205 = vpop.f32.mrb[0].mxu0
    %v206 = vpop.f32.mrb[0].mxu0
    %v207 = vpop.f32.mrb[0].mxu0
    %208 = vdwg.mxu0
    %v209 = vadd.f32 %v116, %v204
    %v210 = vxor.u32 %v209, 2147483648
    %v211 = vmul.f32 %v210, 1.442695
    %v212 = vpow.pop %v211
    %v213 = vadd.f32 %v212, 1.0
    %v214 = vrcp.pop %v213
    %v215 = vmul.f32 1.0, %v214
    %217 = vrot.lane.b32.xlu0 %v204, 64
    %v218 = vpop.permute.xlu0 %217
    %v220 = vmul.f32 %v215, %v218
    %222 = vrot.lane.b32.xlu0 %v220, 64
    %v223 = vpop.permute.xlu0 %222
    %v225 = vadd.f32 %v116, %v223
    %v226 = vtanh.pop %v225
    %v227 = vsub.f32 1.0, %v215
    %229 = vrot.lane.b32.xlu0 %v226, 96
    %v230 = vpop.permute.xlu0 %229
    %v232 = vmul.f32 %v227, %v230
    %234 = vrot.lane.b32.xlu0 %v146, 32
    %v235 = vpop.permute.xlu0 %234
    %v237 = vmul.f32 %v215, %v235
    %v238 = vadd.f32 %v232, %v237
    %v239 = vpack.c.bf16 %v238, %v238
    %241 = vrot.lane.b32.xlu0 %v239, 96
    %v242 = vpop.permute.xlu0 %241
    %v244 = vsel %vm68, %v242, 0
    %246 = vmatprep.subr.bf16.mxu0 0
    %247 = vmatpush1.bf16.msra.mxu0 %v162
    %248 = vmatprep.subr.bf16.mxu0 0
    %249 = vmatpush1.bf16.msra.mxu0 %v163
    %250 = vmatprep.subr.bf16.mxu0 0
    %251 = vmatpush1.bf16.msra.mxu0 0
    %252 = vmatprep.subr.bf16.mxu0 0
    %253 = vmatpush1.bf16.msra.mxu0 0
    %254 = vmatprep.subr.bf16.mxu0 0
    %255 = vmatpush1.bf16.msra.mxu0 0
    %256 = vmatprep.subr.bf16.mxu0 0
    %257 = vmatpush1.bf16.msra.mxu0 0
    %258 = vmatprep.subr.bf16.mxu0 0
    %259 = vmatpush1.bf16.msra.mxu0 0
    %260 = vmatprep.subr.bf16.mxu0 0
    %261 = vmatpush1.bf16.msra.mxu0 0
    %262 = vmatprep.subr.bf16.mxu0 0
    %263 = vmatpush1.bf16.msra.mxu0 0
    %264 = vmatprep.subr.bf16.mxu0 0
    %265 = vmatpush1.bf16.msra.mxu0 0
    %266 = vmatprep.subr.bf16.mxu0 0
    %267 = vmatpush1.bf16.msra.mxu0 0
    %268 = vmatprep.subr.bf16.mxu0 0
    %269 = vmatpush1.bf16.msra.mxu0 0
    %270 = vmatprep.subr.bf16.mxu0 0
    %271 = vmatpush1.bf16.msra.mxu0 0
    %272 = vmatprep.subr.bf16.mxu0 0
    %273 = vmatpush1.bf16.msra.mxu0 0
    %274 = vmatprep.subr.bf16.mxu0 0
    %275 = vmatpush1.bf16.msra.mxu0 0
    %276 = vmatprep.subr.bf16.mxu0 0
    %277 = vmatpush1.bf16.msra.mxu0 0
    %278 = vmatprep.mubr.bf16.mxu0 0
    %279 = vmatmul.mubr.bf16.gmra.mrb[0].mxu0 %v244
    %v280 = vpop.f32.mrb[0].mxu0
    %v281 = vadd.f32 %v152, %v280
    %v282 = vpop.f32.mrb[0].mxu0
    %v283 = vpop.f32.mrb[0].mxu0
    %v284 = vpop.f32.mrb[0].mxu0
    %285 = vdwg.mxu0
    %v286 = vadd.f32 %v119, %v281
    %v287 = vxor.u32 %v286, 2147483648
    %v288 = vmul.f32 %v287, 1.442695
    %v289 = vpow.pop %v288
    %v290 = vadd.f32 %v289, 1.0
    %v291 = vrcp.pop %v290
    %v292 = vmul.f32 1.0, %v291
    %294 = vrot.lane.b32.xlu0 %v281, 64
    %v295 = vpop.permute.xlu0 %294
    %v297 = vmul.f32 %v292, %v295
    %299 = vrot.lane.b32.xlu0 %v297, 64
    %v300 = vpop.permute.xlu0 %299
    %v302 = vadd.f32 %v119, %v300
    %v303 = vtanh.pop %v302
    %v304 = vsub.f32 1.0, %v292
    %306 = vrot.lane.b32.xlu0 %v303, 96
    %v307 = vpop.permute.xlu0 %306
    %v309 = vmul.f32 %v304, %v307
    %v310 = vmul.f32 %v292, %v238
    %v311 = vadd.f32 %v309, %v310
    %v312 = vpack.c.bf16 %v311, %v311
    %314 = vrot.lane.b32.xlu0 %v312, 96
    %v315 = vpop.permute.xlu0 %314
    %v317 = vsel %vm68, %v315, 0
    %319 = vmatprep.subr.bf16.mxu0 0
    %320 = vmatpush1.bf16.msra.mxu0 %v162
    %321 = vmatprep.subr.bf16.mxu0 0
    %322 = vmatpush1.bf16.msra.mxu0 %v163
    %323 = vmatprep.subr.bf16.mxu0 0
    %324 = vmatpush1.bf16.msra.mxu0 0
    %325 = vmatprep.subr.bf16.mxu0 0
    %326 = vmatpush1.bf16.msra.mxu0 0
    %327 = vmatprep.subr.bf16.mxu0 0
    %328 = vmatpush1.bf16.msra.mxu0 0
    %329 = vmatprep.subr.bf16.mxu0 0
    %330 = vmatpush1.bf16.msra.mxu0 0
    %331 = vmatprep.subr.bf16.mxu0 0
    %332 = vmatpush1.bf16.msra.mxu0 0
    %333 = vmatprep.subr.bf16.mxu0 0
    %334 = vmatpush1.bf16.msra.mxu0 0
    %335 = vmatprep.subr.bf16.mxu0 0
    %336 = vmatpush1.bf16.msra.mxu0 0
    %337 = vmatprep.subr.bf16.mxu0 0
    %338 = vmatpush1.bf16.msra.mxu0 0
    %339 = vmatprep.subr.bf16.mxu0 0
    %340 = vmatpush1.bf16.msra.mxu0 0
    %341 = vmatprep.subr.bf16.mxu0 0
    %342 = vmatpush1.bf16.msra.mxu0 0
    %343 = vmatprep.subr.bf16.mxu0 0
    %344 = vmatpush1.bf16.msra.mxu0 0
    %345 = vmatprep.subr.bf16.mxu0 0
    %346 = vmatpush1.bf16.msra.mxu0 0
    %347 = vmatprep.subr.bf16.mxu0 0
    %348 = vmatpush1.bf16.msra.mxu0 0
    %349 = vmatprep.subr.bf16.mxu0 0
    %350 = vmatpush1.bf16.msra.mxu0 0
    %351 = vmatprep.mubr.bf16.mxu0 0
    %352 = vmatmul.mubr.bf16.gmra.mrb[0].mxu0 %v317
    %v353 = vpop.f32.mrb[0].mxu0
    %v354 = vadd.f32 %v152, %v353
    %v355 = vpop.f32.mrb[0].mxu0
    %v356 = vpop.f32.mrb[0].mxu0
    %v357 = vpop.f32.mrb[0].mxu0
    %358 = vdwg.mxu0
    %v359 = vadd.f32 %v124, %v354
    %v360 = vxor.u32 %v359, 2147483648
    %v361 = vmul.f32 %v360, 1.442695
    %v362 = vpow.pop %v361
    %v363 = vadd.f32 %v362, 1.0
    %v364 = vrcp.pop %v363
    %v365 = vmul.f32 1.0, %v364
    %367 = vrot.lane.b32.xlu0 %v354, 64
    %v368 = vpop.permute.xlu0 %367
    %v370 = vmul.f32 %v365, %v368
    %372 = vrot.lane.b32.xlu0 %v370, 64
    %v373 = vpop.permute.xlu0 %372
    %v375 = vadd.f32 %v124, %v373
    %v376 = vtanh.pop %v375
    %v377 = vsub.f32 1.0, %v365
    %379 = vrot.lane.b32.xlu0 %v376, 96
    %v380 = vpop.permute.xlu0 %379
    %v382 = vmul.f32 %v377, %v380
    %v383 = vmul.f32 %v365, %v311
    %v384 = vadd.f32 %v382, %v383
    %v385 = vpack.c.bf16 %v384, %v384
    %387 = vrot.lane.b32.xlu0 %v385, 96
    %v388 = vpop.permute.xlu0 %387
    %v390 = vsel %vm68, %v388, 0
    %392 = vmatprep.subr.bf16.mxu0 0
    %393 = vmatpush1.bf16.msra.mxu0 %v162
    %394 = vmatprep.subr.bf16.mxu0 0
    %395 = vmatpush1.bf16.msra.mxu0 %v163
    %396 = vmatprep.subr.bf16.mxu0 0
    %397 = vmatpush1.bf16.msra.mxu0 0
    %398 = vmatprep.subr.bf16.mxu0 0
    %399 = vmatpush1.bf16.msra.mxu0 0
    %400 = vmatprep.subr.bf16.mxu0 0
    %401 = vmatpush1.bf16.msra.mxu0 0
    %402 = vmatprep.subr.bf16.mxu0 0
    %403 = vmatpush1.bf16.msra.mxu0 0
    %404 = vmatprep.subr.bf16.mxu0 0
    %405 = vmatpush1.bf16.msra.mxu0 0
    %406 = vmatprep.subr.bf16.mxu0 0
    %407 = vmatpush1.bf16.msra.mxu0 0
    %408 = vmatprep.subr.bf16.mxu0 0
    %409 = vmatpush1.bf16.msra.mxu0 0
    %410 = vmatprep.subr.bf16.mxu0 0
    %411 = vmatpush1.bf16.msra.mxu0 0
    %412 = vmatprep.subr.bf16.mxu0 0
    %413 = vmatpush1.bf16.msra.mxu0 0
    %414 = vmatprep.subr.bf16.mxu0 0
    %415 = vmatpush1.bf16.msra.mxu0 0
    %416 = vmatprep.subr.bf16.mxu0 0
    %417 = vmatpush1.bf16.msra.mxu0 0
    %418 = vmatprep.subr.bf16.mxu0 0
    %419 = vmatpush1.bf16.msra.mxu0 0
    %420 = vmatprep.subr.bf16.mxu0 0
    %421 = vmatpush1.bf16.msra.mxu0 0
    %422 = vmatprep.subr.bf16.mxu0 0
    %423 = vmatpush1.bf16.msra.mxu0 0
    %424 = vmatprep.mubr.bf16.mxu0 0
    %425 = vmatmul.mubr.bf16.gmra.mrb[0].mxu0 %v390
    %v426 = vpop.f32.mrb[0].mxu0
    %v427 = vadd.f32 %v152, %v426
    %v428 = vpop.f32.mrb[0].mxu0
    %v429 = vpop.f32.mrb[0].mxu0
    %v430 = vpop.f32.mrb[0].mxu0
    %431 = vdwg.mxu0
    %v432 = vadd.f32 %v127, %v427
    %v433 = vxor.u32 %v432, 2147483648
    %v434 = vmul.f32 %v433, 1.442695
    %v435 = vpow.pop %v434
    %v436 = vadd.f32 %v435, 1.0
    %v437 = vrcp.pop %v436
    %v438 = vmul.f32 1.0, %v437
    %440 = vrot.lane.b32.xlu0 %v427, 64
    %v441 = vpop.permute.xlu0 %440
    %v443 = vmul.f32 %v438, %v441
    %445 = vrot.lane.b32.xlu0 %v443, 64
    %v446 = vpop.permute.xlu0 %445
    %v448 = vadd.f32 %v127, %v446
    %v449 = vtanh.pop %v448
    %v450 = vsub.f32 1.0, %v438
    %452 = vrot.lane.b32.xlu0 %v449, 96
    %v453 = vpop.permute.xlu0 %452
    %v455 = vmul.f32 %v450, %v453
    %v456 = vmul.f32 %v438, %v384
    %v457 = vadd.f32 %v455, %v456
    %v458 = vpack.c.bf16 %v457, %v457
    %460 = vrot.lane.b32.xlu0 %v458, 96
    %v461 = vpop.permute.xlu0 %460
    %v463 = vsel %vm68, %v461, 0
    %465 = vmatprep.subr.bf16.mxu0 0
    %466 = vmatpush1.bf16.msra.mxu0 %v162
    %467 = vmatprep.subr.bf16.mxu0 0
    %468 = vmatpush1.bf16.msra.mxu0 %v163
    %469 = vmatprep.subr.bf16.mxu0 0
    %470 = vmatpush1.bf16.msra.mxu0 0
    %471 = vmatprep.subr.bf16.mxu0 0
    %472 = vmatpush1.bf16.msra.mxu0 0
    %473 = vmatprep.subr.bf16.mxu0 0
    %474 = vmatpush1.bf16.msra.mxu0 0
    %475 = vmatprep.subr.bf16.mxu0 0
    %476 = vmatpush1.bf16.msra.mxu0 0
    %477 = vmatprep.subr.bf16.mxu0 0
    %478 = vmatpush1.bf16.msra.mxu0 0
    %479 = vmatprep.subr.bf16.mxu0 0
    %480 = vmatpush1.bf16.msra.mxu0 0
    %481 = vmatprep.subr.bf16.mxu0 0
    %482 = vmatpush1.bf16.msra.mxu0 0
    %483 = vmatprep.subr.bf16.mxu0 0
    %484 = vmatpush1.bf16.msra.mxu0 0
    %485 = vmatprep.subr.bf16.mxu0 0
    %486 = vmatpush1.bf16.msra.mxu0 0
    %487 = vmatprep.subr.bf16.mxu0 0
    %488 = vmatpush1.bf16.msra.mxu0 0
    %489 = vmatprep.subr.bf16.mxu0 0
    %490 = vmatpush1.bf16.msra.mxu0 0
    %491 = vmatprep.subr.bf16.mxu0 0
    %492 = vmatpush1.bf16.msra.mxu0 0
    %493 = vmatprep.subr.bf16.mxu0 0
    %494 = vmatpush1.bf16.msra.mxu0 0
    %495 = vmatprep.subr.bf16.mxu0 0
    %496 = vmatpush1.bf16.msra.mxu0 0
    %497 = vmatprep.mubr.bf16.mxu0 0
    %498 = vmatmul.mubr.bf16.gmra.mrb[0].mxu0 %v463
    %v499 = vpop.f32.mrb[0].mxu0
    %v500 = vadd.f32 %v152, %v499
    %v501 = vpop.f32.mrb[0].mxu0
    %v502 = vpop.f32.mrb[0].mxu0
    %v503 = vpop.f32.mrb[0].mxu0
    %504 = vdwg.mxu0
    %v505 = vadd.f32 %v132, %v500
    %v506 = vxor.u32 %v505, 2147483648
    %v507 = vmul.f32 %v506, 1.442695
    %v508 = vpow.pop %v507
    %v509 = vadd.f32 %v508, 1.0
    %v510 = vrcp.pop %v509
    %v511 = vmul.f32 1.0, %v510
    %513 = vrot.lane.b32.xlu0 %v500, 64
    %v514 = vpop.permute.xlu0 %513
    %v516 = vmul.f32 %v511, %v514
    %518 = vrot.lane.b32.xlu0 %v516, 64
    %v519 = vpop.permute.xlu0 %518
    %v521 = vadd.f32 %v132, %v519
    %v522 = vtanh.pop %v521
    %v523 = vsub.f32 1.0, %v511
    %525 = vrot.lane.b32.xlu0 %v522, 96
    %v526 = vpop.permute.xlu0 %525
    %v528 = vmul.f32 %v523, %v526
    %v529 = vmul.f32 %v511, %v457
    %v530 = vadd.f32 %v528, %v529
    %v531 = vpack.c.bf16 %v530, %v530
    %533 = vrot.lane.b32.xlu0 %v531, 96
    %v534 = vpop.permute.xlu0 %533
    %v536 = vsel %vm68, %v534, 0
    %538 = vmatprep.subr.bf16.mxu0 0
    %539 = vmatpush1.bf16.msra.mxu0 %v162
    %540 = vmatprep.subr.bf16.mxu0 0
    %541 = vmatpush1.bf16.msra.mxu0 %v163
    %542 = vmatprep.subr.bf16.mxu0 0
    %543 = vmatpush1.bf16.msra.mxu0 0
    %544 = vmatprep.subr.bf16.mxu0 0
    %545 = vmatpush1.bf16.msra.mxu0 0
    %546 = vmatprep.subr.bf16.mxu0 0
    %547 = vmatpush1.bf16.msra.mxu0 0
    %548 = vmatprep.subr.bf16.mxu0 0
    %549 = vmatpush1.bf16.msra.mxu0 0
    %550 = vmatprep.subr.bf16.mxu0 0
    %551 = vmatpush1.bf16.msra.mxu0 0
    %552 = vmatprep.subr.bf16.mxu0 0
    %553 = vmatpush1.bf16.msra.mxu0 0
    %554 = vmatprep.subr.bf16.mxu0 0
    %555 = vmatpush1.bf16.msra.mxu0 0
    %556 = vmatprep.subr.bf16.mxu0 0
    %557 = vmatpush1.bf16.msra.mxu0 0
    %558 = vmatprep.subr.bf16.mxu0 0
    %559 = vmatpush1.bf16.msra.mxu0 0
    %560 = vmatprep.subr.bf16.mxu0 0
    %561 = vmatpush1.bf16.msra.mxu0 0
    %562 = vmatprep.subr.bf16.mxu0 0
    %563 = vmatpush1.bf16.msra.mxu0 0
    %564 = vmatprep.subr.bf16.mxu0 0
    %565 = vmatpush1.bf16.msra.mxu0 0
    %566 = vmatprep.subr.bf16.mxu0 0
    %567 = vmatpush1.bf16.msra.mxu0 0
    %568 = vmatprep.subr.bf16.mxu0 0
    %569 = vmatpush1.bf16.msra.mxu0 0
    %570 = vmatprep.mubr.bf16.mxu0 0
    %571 = vmatmul.mubr.bf16.gmra.mrb[0].mxu0 %v536
    %v572 = vpop.f32.mrb[0].mxu0
    %v573 = vadd.f32 %v152, %v572
    %v574 = vpop.f32.mrb[0].mxu0
    %v575 = vpop.f32.mrb[0].mxu0
    %v576 = vpop.f32.mrb[0].mxu0
    %577 = vdwg.mxu0
    %v578 = vadd.f32 %v135, %v573
    %v579 = vxor.u32 %v578, 2147483648
    %v580 = vmul.f32 %v579, 1.442695
    %v581 = vpow.pop %v580
    %v582 = vadd.f32 %v581, 1.0
    %v583 = vrcp.pop %v582
    %v584 = vmul.f32 1.0, %v583
    %586 = vrot.lane.b32.xlu0 %v573, 64
    %v587 = vpop.permute.xlu0 %586
    %v589 = vmul.f32 %v584, %v587
    %591 = vrot.lane.b32.xlu0 %v589, 64
    %v592 = vpop.permute.xlu0 %591
    %v594 = vadd.f32 %v135, %v592
    %v595 = vtanh.pop %v594
    %v596 = vsub.f32 1.0, %v584
    %598 = vrot.lane.b32.xlu0 %v595, 96
    %v599 = vpop.permute.xlu0 %598
    %v601 = vmul.f32 %v596, %v599
    %v602 = vmul.f32 %v584, %v530
    %v603 = vadd.f32 %v601, %v602
    %v604 = vpack.c.bf16 %v603, %v603
    %606 = vrot.lane.b32.xlu0 %v604, 96
    %v607 = vpop.permute.xlu0 %606
    %v609 = vsel %vm68, %v607, 0
    %611 = vmatprep.subr.bf16.mxu0 0
    %612 = vmatpush1.bf16.msra.mxu0 %v162
    %613 = vmatprep.subr.bf16.mxu0 0
    %614 = vmatpush1.bf16.msra.mxu0 %v163
    %615 = vmatprep.subr.bf16.mxu0 0
    %616 = vmatpush1.bf16.msra.mxu0 0
    %617 = vmatprep.subr.bf16.mxu0 0
    %618 = vmatpush1.bf16.msra.mxu0 0
    %619 = vmatprep.subr.bf16.mxu0 0
    %620 = vmatpush1.bf16.msra.mxu0 0
    %621 = vmatprep.subr.bf16.mxu0 0
    %622 = vmatpush1.bf16.msra.mxu0 0
    %623 = vmatprep.subr.bf16.mxu0 0
    %624 = vmatpush1.bf16.msra.mxu0 0
    %625 = vmatprep.subr.bf16.mxu0 0
    %626 = vmatpush1.bf16.msra.mxu0 0
    %627 = vmatprep.subr.bf16.mxu0 0
    %628 = vmatpush1.bf16.msra.mxu0 0
    %629 = vmatprep.subr.bf16.mxu0 0
    %630 = vmatpush1.bf16.msra.mxu0 0
    %631 = vmatprep.subr.bf16.mxu0 0
    %632 = vmatpush1.bf16.msra.mxu0 0
    %633 = vmatprep.subr.bf16.mxu0 0
    %634 = vmatpush1.bf16.msra.mxu0 0
    %635 = vmatprep.subr.bf16.mxu0 0
    %636 = vmatpush1.bf16.msra.mxu0 0
    %637 = vmatprep.subr.bf16.mxu0 0
    %638 = vmatpush1.bf16.msra.mxu0 0
    %639 = vmatprep.subr.bf16.mxu0 0
    %640 = vmatpush1.bf16.msra.mxu0 0
    %641 = vmatprep.subr.bf16.mxu0 0
    %642 = vmatpush1.bf16.msra.mxu0 0
    %643 = vmatprep.mubr.bf16.mxu0 0
    %644 = vmatmul.mubr.bf16.gmra.mrb[0].mxu0 %v609
    %v645 = vpop.f32.mrb[0].mxu0
    %v646 = vadd.f32 %v152, %v645
    %v647 = vpop.f32.mrb[0].mxu0
    %v648 = vpop.f32.mrb[0].mxu0
    %v649 = vpop.f32.mrb[0].mxu0
    %650 = vdwg.mxu0
    %v651 = vadd.f32 %v140, %v646
    %v652 = vxor.u32 %v651, 2147483648
    %v653 = vmul.f32 %v652, 1.442695
    %v654 = vpow.pop %v653
    %v655 = vadd.f32 %v654, 1.0
    %v656 = vrcp.pop %v655
    %v657 = vmul.f32 1.0, %v656
    %659 = vrot.lane.b32.xlu0 %v646, 64
    %v660 = vpop.permute.xlu0 %659
    %v662 = vmul.f32 %v657, %v660
    %664 = vrot.lane.b32.xlu0 %v662, 64
    %v665 = vpop.permute.xlu0 %664
    %v667 = vadd.f32 %v140, %v665
    %v668 = vtanh.pop %v667
    %v669 = vsub.f32 1.0, %v657
    %671 = vrot.lane.b32.xlu0 %v668, 96
    %v672 = vpop.permute.xlu0 %671
    %v674 = vmul.f32 %v669, %v672
    %v675 = vmul.f32 %v657, %v603
    %v676 = vadd.f32 %v674, %v675
    %v677 = vpack.c.bf16 %v676, %v676
    %679 = vrot.lane.b32.xlu0 %v677, 96
    %v680 = vpop.permute.xlu0 %679
    %v682 = vsel %vm68, %v680, 0
    %684 = vmatprep.subr.bf16.mxu0 0
    %685 = vmatpush1.bf16.msra.mxu0 %v162
    %686 = vmatprep.subr.bf16.mxu0 0
    %687 = vmatpush1.bf16.msra.mxu0 %v163
    %688 = vmatprep.subr.bf16.mxu0 0
    %689 = vmatpush1.bf16.msra.mxu0 0
    %690 = vmatprep.subr.bf16.mxu0 0
    %691 = vmatpush1.bf16.msra.mxu0 0
    %692 = vmatprep.subr.bf16.mxu0 0
    %693 = vmatpush1.bf16.msra.mxu0 0
    %694 = vmatprep.subr.bf16.mxu0 0
    %695 = vmatpush1.bf16.msra.mxu0 0
    %696 = vmatprep.subr.bf16.mxu0 0
    %697 = vmatpush1.bf16.msra.mxu0 0
    %698 = vmatprep.subr.bf16.mxu0 0
    %699 = vmatpush1.bf16.msra.mxu0 0
    %700 = vmatprep.subr.bf16.mxu0 0
    %701 = vmatpush1.bf16.msra.mxu0 0
    %702 = vmatprep.subr.bf16.mxu0 0
    %703 = vmatpush1.bf16.msra.mxu0 0
    %704 = vmatprep.subr.bf16.mxu0 0
    %705 = vmatpush1.bf16.msra.mxu0 0
    %706 = vmatprep.subr.bf16.mxu0 0
    %707 = vmatpush1.bf16.msra.mxu0 0
    %708 = vmatprep.subr.bf16.mxu0 0
    %709 = vmatpush1.bf16.msra.mxu0 0
    %710 = vmatprep.subr.bf16.mxu0 0
    %711 = vmatpush1.bf16.msra.mxu0 0
    %712 = vmatprep.subr.bf16.mxu0 0
    %713 = vmatpush1.bf16.msra.mxu0 0
    %714 = vmatprep.subr.bf16.mxu0 0
    %715 = vmatpush1.bf16.msra.mxu0 0
    %716 = vmatprep.mubr.bf16.mxu0 0
    %717 = vmatmul.mubr.bf16.gmra.mrb[0].mxu0 %v682
    %v718 = vpop.f32.mrb[0].mxu0
    %v719 = vadd.f32 %v152, %v718
    %v720 = vpop.f32.mrb[0].mxu0
    %v721 = vpop.f32.mrb[0].mxu0
    %v722 = vpop.f32.mrb[0].mxu0
    %723 = vdwg.mxu0
    %v724 = vadd.f32 %v143, %v719
    %v725 = vxor.u32 %v724, 2147483648
    %v726 = vmul.f32 %v725, 1.442695
    %v727 = vpow.pop %v726
    %v728 = vadd.f32 %v727, 1.0
    %v729 = vrcp.pop %v728
    %v730 = vmul.f32 1.0, %v729
    %732 = vrot.lane.b32.xlu0 %v719, 64
    %v733 = vpop.permute.xlu0 %732
    %v735 = vmul.f32 %v730, %v733
    %737 = vrot.lane.b32.xlu0 %v735, 64
    %v738 = vpop.permute.xlu0 %737
    %v740 = vadd.f32 %v143, %v738
    %v741 = vtanh.pop %v740
    %v742 = vsub.f32 1.0, %v730
    %744 = vrot.lane.b32.xlu0 %v741, 96
    %v745 = vpop.permute.xlu0 %744
    %v747 = vmul.f32 %v742, %v745
    %v748 = vmul.f32 %v730, %v676
    %v749 = vadd.f32 %v747, %v748
    %751 = vrot.lane.b32.xlu0 %v749, 96
    %v752 = vpop.permute.xlu0 %751
    %754 = vst.msk [vmem:[#allocation2] sm:$0xff] %vm68, %v752
    // Predicated region
    $region26: #{seq_my_encoder_forward.1} parent=1 // pred_check
      %p755 = pneg %p22
    $region27: #{seq_my_encoder_forward.1} parent=1 // pred_check_branch
      %757 = sbr.rel (%p755) target = $region29
    $region28: #{seq_my_encoder_forward.1} parent=1 // pred_region
      %758 = vst.msk [vmem:[#allocation3] sm:$0xff] %vm68, %v752
    $region29: #{seq_my_encoder_forward.1} parent=1 // pred_fallthru
      _
    // Predicated region
    $region30: #{seq_my_encoder_forward.1} parent=1 // pred_check
      _
    $region31: #{seq_my_encoder_forward.1} parent=1 // pred_check_branch
      %760 = sbr.rel (0) target = $region33
    $region32: #{seq_my_encoder_forward.1} parent=1 // pred_region
      %s762 = ssub.s32 128, 128
      %763 = vsyncadd [#allocation4], %s762
      %s765 = sshll.u32 [#allocation3], 4
      %s766 = int_to_ptr.vmem [resolvable:$true] %s765
      %768 = dma.vmem_to_hbm [thread:$0]  %s766, 128, %s5, [#allocation4]
    $region33: #{seq_my_encoder_forward.1} parent=1 // pred_fallthru
      _
    // Predicated region
    $region34: #{seq_my_encoder_forward.1} parent=1 // pred_check
      _
    $region35: #{seq_my_encoder_forward.1} parent=1 // pred_check_branch
      %770 = sbr.rel (0) target = $region37
    $region36: #{seq_my_encoder_forward.1} parent=1 // pred_region
      %771 = dma.done [#allocation4], 128
    $region37: #{seq_my_encoder_forward.1} parent=1 // pred_fallthru
      _
    %772 = vsyncpa [#allocation4], 1

</llo_original>
